<compile_context>
chip_gen: v6e
topology: v6e:2x2x1
jax: 0.10.0
libtpu: 0.0.40
codegen_flags: <defaults>
</compile_context>

<pallas_src>
import functools

import numpy as np
import jax
import jax.numpy as jnp
from jax.experimental import pallas as pl
from jax.experimental.pallas import tpu as pltpu

_LANE = 128            # TPU lane width (last-dim tile)
_SUBLANE_BF16 = 16     # bf16 sublane packing
_M_GROUP_BYTES = 4 << 20   # bf16 band-matrix budget per scale group (single buffer)


def _round_up(x, m):
    return ((x + m - 1) // m) * m


# ----------------------------------------------------------------------------
# pywt 'mexh' machinery reproduced in plain numpy (parameter / filter setup)
# ----------------------------------------------------------------------------
def _mexh_wavefun(precision):
    # pywt ContinuousWavelet('mexh').wavefun(precision): support [-8, 8]
    x = np.linspace(-8.0, 8.0, 2 ** precision)
    psi = (2.0 / (np.sqrt(3.0) * np.pi ** 0.25)) * (1.0 - x ** 2) * np.exp(-x ** 2 / 2.0)
    return psi, x


def _mexh_central_frequency(precision=8):
    # replicates pywt.central_frequency('mexh')  (== 0.25)
    psi, x = _mexh_wavefun(precision)
    domain = float(x[-1] - x[0])
    index = int(np.argmax(np.abs(np.fft.fft(psi)[1:]))) + 2
    if index > len(psi) / 2:
        index = len(psi) - index + 2
    return 1.0 / (domain / (index - 1))


def _frequency2scale(freq_norm):
    # replicates pywt.frequency2scale('mexh', freq / sfreq)
    return _mexh_central_frequency() / np.asarray(freq_norm, dtype=np.float64)


def _integrated_mexh(precision=10):
    # replicates pywt.integrate_wavelet('mexh', precision)
    psi, x = _mexh_wavefun(precision)
    step = x[1] - x[0]
    return np.cumsum(psi) * step, x


def _cwt_filters(scales, precision=10):
    """Per-scale valid-cross-correlation filters equivalent to pywt.cwt('mexh').

    For each scale s:  out[t] = sum_i data[t + a + i] * w[i]   (zeros off the ends)
    """
    int_psi, x = _integrated_mexh(precision)
    step = x[1] - x[0]
    ws, aoffs = [], []
    for scale in scales:
        j = np.arange(scale * (x[-1] - x[0]) + 1) / (scale * step)
        j = j.astype(int)
        if j[-1] >= int_psi.size:
            j = np.extract(j < int_psi.size, j)
        f = int_psi[j][::-1]                              # filter used by np.convolve
        L = f.size
        h = np.diff(np.concatenate([[0.0], f, [0.0]]))    # length L + 1 (diff step)
        w_rev = -np.sqrt(scale) * h[::-1]                 # flip -> cross-correlation form
        off = int(np.floor((L - 2) / 2.0))                # center-crop offset
        a = off + 1 - L
        ws.append(w_rev)
        aoffs.append((a, off))
    return ws, aoffs


# ----------------------------------------------------------------------------
# Tiling / band-matrix planning
# ----------------------------------------------------------------------------
def _pick_time_tile(T):
    # Prefer >= 512-wide lane tiles (HBM roofline); fall back to 256/128; pad T
    # up to a multiple of the tile if nothing divides it.
    for cand in (512, 256, 128):
        if T >= cand and T % cand == 0:
            return cand, T
    cand = 512 if T >= 512 else _LANE
    return cand, _round_up(T, cand)


def _band_geometry(aoffs, tn):
    pad_left = max(-a for a, _ in aoffs)
    pad_right = max(off for _, off in aoffs) + 1
    W_pad = _round_up(tn + pad_left + pad_right, _LANE)
    return pad_left, pad_right, W_pad


def _pick_group_size(S, W_pad, tn):
    # Fuse as many scales as fit the per-group VMEM budget into one MXU dot.
    per_scale = W_pad * tn * 2                            # bf16 bytes
    g = max(1, _M_GROUP_BYTES // per_scale)
    return int(min(S, g))


def _build_band_groups(ws, aoffs, tn, W_pad, pad_left, G):
    """Tile-invariant compact band matrices, grouped along the matmul N dim.

    For an output tile starting at t0 and scale s in group g:
        out[s, t0 + u] = sum_j D_padded[:, t0 + j] * M[g, j, (s % G) * tn + u]
    where D_padded carries the signal at column offset pad_left.  M does not
    depend on t0, so each group's (W_pad, G*tn) matrix is loaded from HBM once
    and reused for every time tile.
    """
    S = len(ws)
    n_groups = -(-S // G)
    S_pad = n_groups * G
    M = np.zeros((S_pad, W_pad, tn), np.float64)
    for s, (w, (a, _off)) in enumerate(zip(ws, aoffs)):
        shift = pad_left + a                              # >= 0 by construction
        for u in range(tn):
            M[s, u + shift:u + shift + w.size, u] = w
    Mg = (M.reshape(n_groups, G, W_pad, tn)
            .transpose(0, 2, 1, 3)
            .reshape(n_groups, W_pad, G * tn))
    return Mg, S_pad


# ----------------------------------------------------------------------------
# Pallas kernel: grid = (scale_group, time_tile); one bf16 MXU dot per step
# ----------------------------------------------------------------------------
def _make_cwt_kernel(B, C, C_pad, G, tn, W_pad):
    def kernel(d_ref, m_ref, o_ref):
        # d_ref: (B*C_pad, P_len) bf16 padded signal (constant index -> VMEM resident)
        # m_ref: (W_pad, G*tn)    bf16 compact band matrix for the current scale group
        # o_ref: (B, G, C, tn)    f32 output tile in final layout
        tj = pl.program_id(1)
        t0 = pl.multiple_of(tj * tn, tn)                  # lane-aligned window start
        win = d_ref[:, pl.ds(t0, W_pad)]                  # (B*C_pad, W_pad)
        acc = jnp.dot(win, m_ref[...],                    # native bf16 MXU, f32 acc
                      preferred_element_type=jnp.float32)
        for b in range(B):                                # static unroll, aligned slices
            r0 = b * C_pad
            for s in range(G):
                o_ref[b, s] = acc[r0:r0 + C, s * tn:(s + 1) * tn].astype(o_ref.dtype)
    return kernel


def _cwt_pallas(D, M, *, B, C, C_pad, T_pad, tn, W_pad, G):
    n_groups = M.shape[0]
    S_pad = n_groups * G
    BCp, P_len = D.shape
    n_tt = T_pad // tn
    # VMEM budget: resident D (count 2x for safety) + double-buffered M block +
    # double-buffered out block + dot operand/result intermediates + slack.
    need = (2 * BCp * P_len * 2
            + 2 * W_pad * G * tn * 2
            + 2 * B * G * C * tn * 4
            + BCp * (W_pad + G * tn) * 4
            + (1 << 20))
    vmem_limit = int(min(max(2 * need, 16 << 20), 64 << 20))
    kernel = _make_cwt_kernel(B, C, C_pad, G, tn, W_pad)
    return pl.pallas_call(
        kernel,
        out_shape=jax.ShapeDtypeStruct((B, S_pad, C, T_pad), jnp.float32),
        grid_spec=pltpu.PrefetchScalarGridSpec(
            num_scalar_prefetch=0,
            grid=(n_groups, n_tt),                        # scale-group outer, time inner
            in_specs=[
                # full padded signal: constant block index -> DMA'd once, stays in VMEM
                pl.BlockSpec((BCp, P_len), lambda g, t: (0, 0)),
                # fused per-group band: block index changes only when the group changes
                pl.BlockSpec((None, W_pad, G * tn), lambda g, t: (g, 0, 0)),
            ],
            # write the final (B, S, C, T) layout directly (no wrapper transpose)
            out_specs=pl.BlockSpec((B, G, C, tn), lambda g, t: (0, g, 0, t)),
        ),
        compiler_params=pltpu.CompilerParams(
            dimension_semantics=("parallel", "parallel"),
            vmem_limit_bytes=vmem_limit,
        ),
    )(D, M)


def _forward(X, M, *, B, C, C_pad, T, T_pad, tn, W_pad, G, S, pad_left, P_len, temporal):
    Xf = X.astype(jnp.float32)
    # Pad channel rows to the bf16 sublane tile so every per-batch slice inside
    # the kernel is sublane-aligned; pad time for the window + tile geometry.
    D = jnp.pad(
        Xf.astype(jnp.bfloat16),
        ((0, 0), (0, C_pad - C), (pad_left, P_len - pad_left - T)),
    ).reshape(B * C_pad, P_len)
    waves = _cwt_pallas(D, M, B=B, C=C, C_pad=C_pad,
                        T_pad=T_pad, tn=tn, W_pad=W_pad, G=G)
    waves = waves[:, :S, :, :T]                           # crop scale / time padding
    if temporal:
        waves = jnp.concatenate([Xf[:, None], waves], axis=1)
    return waves                                          # (B, S[+1], C, T)


# ----------------------------------------------------------------------------
# Module wrapper (mirrors RickerWavelet.__init__ / forward)
# ----------------------------------------------------------------------------
class RickerWaveletPallas:
    def __init__(self, init_freq, sfreq, f_min=0.1, f_max=35, temporal=False):
        self.freq = np.asarray(init_freq, np.float64)     # the nn.Parameter values
        self.sfreq = float(sfreq)
        self.f_min = f_min
        self.f_max = f_max
        self.temporal = temporal
        self.n_wavelets = self.freq.shape[0]
        # Like the PyTorch module, scales are fixed at construction time and the
        # pywt path is detached / non-differentiable w.r.t. freq.
        # TODO(synk): no gradient through freq (matches the detach+numpy original).
        self.scales = _frequency2scale(self.freq / self.sfreq)
        self._ws, self._aoffs = _cwt_filters(self.scales)  # taps built once (tiny)
        self._plan_cache = {}                               # (B, C, T) -> plan

    def _plan(self, B, C, T):
        key = (B, C, T)
        plan = self._plan_cache.get(key)
        if plan is None:
            tn, T_pad = _pick_time_tile(T)
            pad_left, _pad_right, W_pad = _band_geometry(self._aoffs, tn)
            S = self.n_wavelets
            G = _pick_group_size(S, W_pad, tn)
            M_np, S_pad = _build_band_groups(self._ws, self._aoffs, tn, W_pad, pad_left, G)
            P_len = T_pad - tn + W_pad                     # multiple of 128 by construction
            C_pad = _round_up(C, _SUBLANE_BF16)
            fn = jax.jit(functools.partial(
                _forward, B=B, C=C, C_pad=C_pad, T=T, T_pad=T_pad, tn=tn,
                W_pad=W_pad, G=G, S=S, pad_left=pad_left, P_len=P_len,
                temporal=self.temporal))
            plan = dict(M=jnp.asarray(M_np, jnp.bfloat16), fn=fn)
            self._plan_cache[key] = plan
        return plan

    def __call__(self, X):
        # X: (batch, channels, time)
        X = jnp.asarray(X, jnp.float32)
        B, C, T = X.shape
        # NOTE: B*C is assumed small (signal rows stay VMEM resident).
        p = self._plan(B, C, T)
        return p["fn"](X, p["M"])                          # (B, S[+1], C, T)


# ----------------------------------------------------------------------------
# Pure-numpy reference that literally replays pywt.cwt's conv path (float64)
# ----------------------------------------------------------------------------
def _ref_cwt_mexh(X_np, scales, precision=10):
    int_psi, x = _integrated_mexh(precision)
    step = x[1] - x[0]
    T = X_np.shape[-1]
    rows = X_np.reshape(-1, T).astype(np.float64)
    out = np.empty((len(scales),) + rows.shape, np.float64)
    for i, scale in enumerate(scales):
        j = np.arange(scale * (x[-1] - x[0]) + 1) / (scale * step)
        j = j.astype(int)
        if j[-1] >= int_psi.size:
            j = np.extract(j < int_psi.size, j)
        int_psi_scale = int_psi[j][::-1]
        conv = np.stack([np.convolve(r, int_psi_scale) for r in rows])
        coef = -np.sqrt(scale) * np.diff(conv, axis=-1)
        d = (coef.shape[-1] - T) / 2.0
        coef = coef[..., int(np.floor(d)):-int(np.ceil(d))]
        out[i] = coef
    return out.reshape((len(scales),) + X_np.shape)


if __name__ == "__main__":
    key = jax.random.PRNGKey(0)
    B, C, T = 2, 4, 128
    sfreq = 64.0
    init_freq = [2.0, 4.0, 8.0, 16.0]   # deterministic "nn.Parameter" init

    X = jax.random.normal(key, (B, C, T), dtype=jnp.float32)

    layer = RickerWaveletPallas(init_freq, sfreq, temporal=False)
    out = jax.block_until_ready(layer(X))
    assert out.shape == (B, len(init_freq), C, T), out.shape
    assert out.dtype == jnp.float32

    # correctness check against the direct pywt-style conv/diff/crop pipeline
    ref = _ref_cwt_mexh(np.asarray(X, np.float64), layer.scales)   # (S, B, C, T)
    ref = np.swapaxes(ref, 0, 1)                                   # (B, S, C, T)
    np.testing.assert_allclose(np.asarray(out), ref, rtol=2e-2, atol=2e-2)

    # temporal=True path: raw signal prepended along the wavelet axis
    layer_t = RickerWaveletPallas(init_freq, sfreq, temporal=True)
    out_t = jax.block_until_ready(layer_t(X))
    assert out_t.shape == (B, len(init_freq) + 1, C, T), out_t.shape
    np.testing.assert_allclose(np.asarray(out_t[:, 0]), np.asarray(X), rtol=0, atol=0)
    np.testing.assert_allclose(np.asarray(out_t[:, 1:]), ref, rtol=2e-2, atol=2e-2)

    print("KERNEL_OK")
</pallas_src>

<mosaic_0001>
module attributes {stable_mosaic.version = 11 : i64} {
  func.func @kernel(%arg0: i32, %arg1: i32, %arg2: memref<32x384xbf16, #tpu.memory_space<vmem>>, %arg3: memref<1x384x512xbf16, #tpu.memory_space<vmem>>, %arg4: memref<2x4x4x128xf32, #tpu.memory_space<vmem>>) attributes {dimension_semantics = [#tpu.dimension_semantics<parallel>, #tpu.dimension_semantics<parallel>], iteration_bounds = array<i64: 1, 1>, scalar_prefetch = 0 : i64, scratch_operands = 0 : i64, tpu.core_type = #tpu.core_type<tc>, window_params = [{pipeline_mode = #tpu.pipeline_mode<synchronous>, transform_indices = @transform_0, window_bounds = array<i64: 32, 384>}, {transform_indices = @transform_1, window_bounds = array<i64: 1, 384, 512>}, {transform_indices = @transform_2, window_bounds = array<i64: 2, 4, 4, 128>}]} {
    %c128_i32 = arith.constant 128 : i32
    %0 = arith.muli %arg1, %c128_i32 : i32
    %1 = tpu.assume_multiple %0, 128 : i32
    %c0 = arith.constant 0 : index
    %2 = arith.index_cast %1 : i32 to index
    %3 = vector.load %arg2[%c0, %2] : memref<32x384xbf16, #tpu.memory_space<vmem>>, vector<32x384xbf16>
    %c0_0 = arith.constant 0 : index
    %c0_1 = arith.constant 0 : index
    %c0_2 = arith.constant 0 : index
    %4 = vector.load %arg3[%c0_0, %c0_1, %c0_2] : memref<1x384x512xbf16, #tpu.memory_space<vmem>>, vector<1x384x512xbf16>
    %5 = vector.shape_cast %4 : vector<1x384x512xbf16> to vector<384x512xbf16>
    %cst = arith.constant dense<0.000000e+00> : vector<32x512xf32>
    %6 = tpu.matmul %3, %5, %cst {dimension_numbers = #tpu.dot_dimension_numbers<[1], [0], [0], [1], [0, 0, 1, 1], [], []>} : vector<32x384xbf16>, vector<384x512xbf16>, vector<32x512xf32> -> vector<32x512xf32>
    %7 = vector.extract_strided_slice %6 {offsets = [0, 0], sizes = [4, 128], strides = [1, 1]} : vector<32x512xf32> to vector<4x128xf32>
    %c0_3 = arith.constant 0 : index
    %c0_4 = arith.constant 0 : index
    %c0_5 = arith.constant 0 : index
    %c0_6 = arith.constant 0 : index
    %8 = vector.load %arg4[%c0_3, %c0_4, %c0_5, %c0_6] : memref<2x4x4x128xf32, #tpu.memory_space<vmem>>, vector<1x1x4x128xf32>
    %9 = vector.shape_cast %8 : vector<1x1x4x128xf32> to vector<4x128xf32>
    %10 = vector.shape_cast %7 : vector<4x128xf32> to vector<1x1x4x128xf32>
    tpu.vector_store %arg4[%c0_3, %c0_4, %c0_5, %c0_6], %10 {strides = array<i32>} : memref<2x4x4x128xf32, #tpu.memory_space<vmem>>, vector<1x1x4x128xf32>,
    %11 = vector.extract_strided_slice %6 {offsets = [0, 128], sizes = [4, 128], strides = [1, 1]} : vector<32x512xf32> to vector<4x128xf32>
    %c0_7 = arith.constant 0 : index
    %c1 = arith.constant 1 : index
    %c0_8 = arith.constant 0 : index
    %c0_9 = arith.constant 0 : index
    %12 = vector.load %arg4[%c0_7, %c1, %c0_8, %c0_9] : memref<2x4x4x128xf32, #tpu.memory_space<vmem>>, vector<1x1x4x128xf32>
    %13 = vector.shape_cast %12 : vector<1x1x4x128xf32> to vector<4x128xf32>
    %14 = vector.shape_cast %11 : vector<4x128xf32> to vector<1x1x4x128xf32>
    tpu.vector_store %arg4[%c0_7, %c1, %c0_8, %c0_9], %14 {strides = array<i32>} : memref<2x4x4x128xf32, #tpu.memory_space<vmem>>, vector<1x1x4x128xf32>,
    %15 = vector.extract_strided_slice %6 {offsets = [0, 256], sizes = [4, 128], strides = [1, 1]} : vector<32x512xf32> to vector<4x128xf32>
    %c0_10 = arith.constant 0 : index
    %c2 = arith.constant 2 : index
    %c0_11 = arith.constant 0 : index
    %c0_12 = arith.constant 0 : index
    %16 = vector.load %arg4[%c0_10, %c2, %c0_11, %c0_12] : memref<2x4x4x128xf32, #tpu.memory_space<vmem>>, vector<1x1x4x128xf32>
    %17 = vector.shape_cast %16 : vector<1x1x4x128xf32> to vector<4x128xf32>
    %18 = vector.shape_cast %15 : vector<4x128xf32> to vector<1x1x4x128xf32>
    tpu.vector_store %arg4[%c0_10, %c2, %c0_11, %c0_12], %18 {strides = array<i32>} : memref<2x4x4x128xf32, #tpu.memory_space<vmem>>, vector<1x1x4x128xf32>,
    %19 = vector.extract_strided_slice %6 {offsets = [0, 384], sizes = [4, 128], strides = [1, 1]} : vector<32x512xf32> to vector<4x128xf32>
    %c0_13 = arith.constant 0 : index
    %c3 = arith.constant 3 : index
    %c0_14 = arith.constant 0 : index
    %c0_15 = arith.constant 0 : index
    %20 = vector.load %arg4[%c0_13, %c3, %c0_14, %c0_15] : memref<2x4x4x128xf32, #tpu.memory_space<vmem>>, vector<1x1x4x128xf32>
    %21 = vector.shape_cast %20 : vector<1x1x4x128xf32> to vector<4x128xf32>
    %22 = vector.shape_cast %19 : vector<4x128xf32> to vector<1x1x4x128xf32>
    tpu.vector_store %arg4[%c0_13, %c3, %c0_14, %c0_15], %22 {strides = array<i32>} : memref<2x4x4x128xf32, #tpu.memory_space<vmem>>, vector<1x1x4x128xf32>,
    %23 = vector.extract_strided_slice %6 {offsets = [16, 0], sizes = [4, 128], strides = [1, 1]} : vector<32x512xf32> to vector<4x128xf32>
    %c1_16 = arith.constant 1 : index
    %c0_17 = arith.constant 0 : index
    %c0_18 = arith.constant 0 : index
    %c0_19 = arith.constant 0 : index
    %24 = vector.load %arg4[%c1_16, %c0_17, %c0_18, %c0_19] : memref<2x4x4x128xf32, #tpu.memory_space<vmem>>, vector<1x1x4x128xf32>
    %25 = vector.shape_cast %24 : vector<1x1x4x128xf32> to vector<4x128xf32>
    %26 = vector.shape_cast %23 : vector<4x128xf32> to vector<1x1x4x128xf32>
    tpu.vector_store %arg4[%c1_16, %c0_17, %c0_18, %c0_19], %26 {strides = array<i32>} : memref<2x4x4x128xf32, #tpu.memory_space<vmem>>, vector<1x1x4x128xf32>,
    %27 = vector.extract_strided_slice %6 {offsets = [16, 128], sizes = [4, 128], strides = [1, 1]} : vector<32x512xf32> to vector<4x128xf32>
    %c1_20 = arith.constant 1 : index
    %c1_21 = arith.constant 1 : index
    %c0_22 = arith.constant 0 : index
    %c0_23 = arith.constant 0 : index
    %28 = vector.load %arg4[%c1_20, %c1_21, %c0_22, %c0_23] : memref<2x4x4x128xf32, #tpu.memory_space<vmem>>, vector<1x1x4x128xf32>
    %29 = vector.shape_cast %28 : vector<1x1x4x128xf32> to vector<4x128xf32>
    %30 = vector.shape_cast %27 : vector<4x128xf32> to vector<1x1x4x128xf32>
    tpu.vector_store %arg4[%c1_20, %c1_21, %c0_22, %c0_23], %30 {strides = array<i32>} : memref<2x4x4x128xf32, #tpu.memory_space<vmem>>, vector<1x1x4x128xf32>,
    %31 = vector.extract_strided_slice %6 {offsets = [16, 256], sizes = [4, 128], strides = [1, 1]} : vector<32x512xf32> to vector<4x128xf32>
    %c1_24 = arith.constant 1 : index
    %c2_25 = arith.constant 2 : index
    %c0_26 = arith.constant 0 : index
    %c0_27 = arith.constant 0 : index
    %32 = vector.load %arg4[%c1_24, %c2_25, %c0_26, %c0_27] : memref<2x4x4x128xf32, #tpu.memory_space<vmem>>, vector<1x1x4x128xf32>
    %33 = vector.shape_cast %32 : vector<1x1x4x128xf32> to vector<4x128xf32>
    %34 = vector.shape_cast %31 : vector<4x128xf32> to vector<1x1x4x128xf32>
    tpu.vector_store %arg4[%c1_24, %c2_25, %c0_26, %c0_27], %34 {strides = array<i32>} : memref<2x4x4x128xf32, #tpu.memory_space<vmem>>, vector<1x1x4x128xf32>,
    %35 = vector.extract_strided_slice %6 {offsets = [16, 384], sizes = [4, 128], strides = [1, 1]} : vector<32x512xf32> to vector<4x128xf32>
    %c1_28 = arith.constant 1 : index
    %c3_29 = arith.constant 3 : index
    %c0_30 = arith.constant 0 : index
    %c0_31 = arith.constant 0 : index
    %36 = vector.load %arg4[%c1_28, %c3_29, %c0_30, %c0_31] : memref<2x4x4x128xf32, #tpu.memory_space<vmem>>, vector<1x1x4x128xf32>
    %37 = vector.shape_cast %36 : vector<1x1x4x128xf32> to vector<4x128xf32>
    %38 = vector.shape_cast %35 : vector<4x128xf32> to vector<1x1x4x128xf32>
    tpu.vector_store %arg4[%c1_28, %c3_29, %c0_30, %c0_31], %38 {strides = array<i32>} : memref<2x4x4x128xf32, #tpu.memory_space<vmem>>, vector<1x1x4x128xf32>,
    return
  }
  func.func @transform_0(%arg0: i32, %arg1: i32) -> (i32, i32) {
    %c0_i32 = arith.constant 0 : i32
    %c0_i32_0 = arith.constant 0 : i32
    %c0_i32_1 = arith.constant 0 : i32
    return %c0_i32, %c0_i32_0 : i32, i32
  }
  func.func @transform_1(%arg0: i32, %arg1: i32) -> (i32, i32, i32) {
    %c0_i32 = arith.constant 0 : i32
    %c0_i32_0 = arith.constant 0 : i32
    %c0_i32_1 = arith.constant 0 : i32
    return %arg0, %c0_i32, %c0_i32_0 : i32, i32, i32
  }
  func.func @transform_2(%arg0: i32, %arg1: i32) -> (i32, i32, i32, i32) {
    %c0_i32 = arith.constant 0 : i32
    %c0_i32_0 = arith.constant 0 : i32
    %c0_i32_1 = arith.constant 0 : i32
    return %c0_i32, %arg0, %c0_i32_0, %arg1 : i32, i32, i32, i32
  }
}

</mosaic_0001>

<llo_original>
// kernel: _forward.1
$region0: #{_forward.1}
  #allocation0 [shape = 'u32[]', space=smem, size = 0x4, offset = 0x4, fixed_abs, tag = 'smem constant byte address 0x4 - core index']
  #allocation1 [shape = 'u32[144,128]{1,0:T(1,128)}', space=vmem, size = 0x12000, scoped, tag = 'internal scratch']
  %s0 = inlined_call_operand.vmem [shape: bf16[32,384], index: 0, kind: input, shape index: {}]
  %s1 = inlined_call_operand.hbm [shape: bf16[1,384,512], index: 1, kind: input, shape index: {}]
  %s2 = inlined_call_operand.hbm [shape: f32[2,4,4,128], index: 2, kind: output, shape index: {}]
  %s3 = sld [smem:[#allocation0]]
  $region22: #{_forward.1} parent=0
    _
  %s5 = ssub.s32 1, %s3
  %s6 = scalar_select 0, %s5, %s3
  $region1: #{_forward.1} parent=0
    #allocation2 [shape = 'u8[393216]{0}', space=vmem, size = 0x60000, scoped, tag = 'input window, operand 1, single buffered']
    #allocation3 [shape = 's32[1]{0}', space=sflag, size = 0x4, scoped, tag = 'scoped memory for _forward.1']
    #allocation4 [shape = 's32[1]{0}', space=sflag, size = 0x4, scoped, tag = 'scoped memory for _forward.1']
    #allocation5 [shape = 'u8[16384]{0}', space=vmem, size = 0x4000, scoped, tag = 'output window, operand 0, single buffered']
    %7 = vsyncpa [#allocation3], 0
    %8 = vsyncpa [#allocation4], 0
    // Predicated region
    $region2: #{_forward.1} parent=1 // pred_check
      _
    $region3: #{_forward.1} parent=1 // pred_check_branch
      %10 = sbr.rel (0) target = $region5
    $region4: #{_forward.1} parent=1 // pred_region
      _
    $region5: #{_forward.1} parent=1 // pred_fallthru
      _
    // Predicated region
    $region6: #{_forward.1} parent=1 // pred_check
      _
    $region7: #{_forward.1} parent=1 // pred_check_branch
      %12 = sbr.rel (0) target = $region9
    $region8: #{_forward.1} parent=1 // pred_region
      %s14 = ssub.s32 12288, 12288
      %15 = vsyncadd [#allocation3], %s14
      %s16 = sshll.u32 [#allocation2], 4
      %s17 = int_to_ptr.vmem [resolvable:$true] %s16
      %22 = dma.hbm_to_vmem [thread:$0]  %s1, 12288, %s17, [#allocation3], 256, 256, 16
    $region9: #{_forward.1} parent=1 // pred_fallthru
      _
    // Predicated region
    $region10: #{_forward.1} parent=1 // pred_check
      _
    $region11: #{_forward.1} parent=1 // pred_check_branch
      %24 = sbr.rel (0) target = $region13
    $region12: #{_forward.1} parent=1 // pred_region
      %25 = dma.done [#allocation3], 12288
    $region13: #{_forward.1} parent=1 // pred_fallthru
      _
    %s27 = smul.u32 0, 128
    %s28 = sshra.s32 %s27, 7
    %s29 = sand.u32 %s27, 127
    %s30 = smul.addr %s28, 4
    %s31 = scalar_lea.vmem %s0, %s30
    %v32 = vld [vmem:[%s31] sm:$0xff]
    %v33 = vld [vmem:[%s31 + $0x8] sm:$0xf]
    %v34 = vld [vmem:[%s31 + $0xc] sm:$0xff]
    %v35 = vld [vmem:[%s31 + $0x14] sm:$0xf]
    %v36 = vld [vmem:[%s31 + $0x18] sm:$0xff]
    %v37 = vld [vmem:[%s31 + $0x20] sm:$0xf]
    %v38 = vld [vmem:[%s31 + $0x24] sm:$0xff]
    %v39 = vld [vmem:[%s31 + $0x2c] sm:$0xf]
    %v40 = vld [vmem:[#allocation2] sm:$0xff]
    %v41 = vld [vmem:[#allocation2 + $0x8] sm:$0xff]
    %v42 = vld [vmem:[#allocation2 + $0x10] sm:$0xff]
    %v43 = vld [vmem:[#allocation2 + $0x18] sm:$0xff]
    %v44 = vld [vmem:[#allocation2 + $0x20] sm:$0xff]
    %v45 = vld [vmem:[#allocation2 + $0x28] sm:$0xff]
    %v46 = vld [vmem:[#allocation2 + $0x30] sm:$0xff]
    %v47 = vld [vmem:[#allocation2 + $0x38] sm:$0xff]
    %v48 = vld [vmem:[#allocation2 + $0x40] sm:$0xff]
    %v49 = vld [vmem:[#allocation2 + $0x48] sm:$0xff]
    %v50 = vld [vmem:[#allocation2 + $0x50] sm:$0xff]
    %v51 = vld [vmem:[#allocation2 + $0x58] sm:$0xff]
    %v52 = vld [vmem:[#allocation2 + $0x60] sm:$0xff]
    %v53 = vld [vmem:[#allocation2 + $0x68] sm:$0xff]
    %v54 = vld [vmem:[#allocation2 + $0x70] sm:$0xff]
    %v55 = vld [vmem:[#allocation2 + $0x78] sm:$0xff]
    %v56 = vld [vmem:[#allocation2 + $0x80] sm:$0xff]
    %v57 = vld [vmem:[#allocation2 + $0x88] sm:$0xff]
    %v58 = vld [vmem:[#allocation2 + $0x90] sm:$0xff]
    %v59 = vld [vmem:[#allocation2 + $0x98] sm:$0xff]
    %v60 = vld [vmem:[#allocation2 + $0xa0] sm:$0xff]
    %v61 = vld [vmem:[#allocation2 + $0xa8] sm:$0xff]
    %v62 = vld [vmem:[#allocation2 + $0xb0] sm:$0xff]
    %v63 = vld [vmem:[#allocation2 + $0xb8] sm:$0xff]
    %v64 = vld [vmem:[#allocation2 + $0xc0] sm:$0xff]
    %v65 = vld [vmem:[#allocation2 + $0xc8] sm:$0xff]
    %v66 = vld [vmem:[#allocation2 + $0xd0] sm:$0xff]
    %v67 = vld [vmem:[#allocation2 + $0xd8] sm:$0xff]
    %v68 = vld [vmem:[#allocation2 + $0xe0] sm:$0xff]
    %v69 = vld [vmem:[#allocation2 + $0xe8] sm:$0xff]
    %v70 = vld [vmem:[#allocation2 + $0xf0] sm:$0xff]
    %v71 = vld [vmem:[#allocation2 + $0xf8] sm:$0xff]
    %v72 = vld [vmem:[#allocation2 + $0x100] sm:$0xff]
    %v73 = vld [vmem:[#allocation2 + $0x108] sm:$0xff]
    %v74 = vld [vmem:[#allocation2 + $0x110] sm:$0xff]
    %v75 = vld [vmem:[#allocation2 + $0x118] sm:$0xff]
    %v76 = vld [vmem:[#allocation2 + $0x120] sm:$0xff]
    %v77 = vld [vmem:[#allocation2 + $0x128] sm:$0xff]
    %v78 = vld [vmem:[#allocation2 + $0x130] sm:$0xff]
    %v79 = vld [vmem:[#allocation2 + $0x138] sm:$0xff]
    %v80 = vld [vmem:[#allocation2 + $0x140] sm:$0xff]
    %v81 = vld [vmem:[#allocation2 + $0x148] sm:$0xff]
    %v82 = vld [vmem:[#allocation2 + $0x150] sm:$0xff]
    %v83 = vld [vmem:[#allocation2 + $0x158] sm:$0xff]
    %v84 = vld [vmem:[#allocation2 + $0x160] sm:$0xff]
    %v85 = vld [vmem:[#allocation2 + $0x168] sm:$0xff]
    %v86 = vld [vmem:[#allocation2 + $0x170] sm:$0xff]
    %v87 = vld [vmem:[#allocation2 + $0x178] sm:$0xff]
    %v88 = vld [vmem:[#allocation2 + $0x180] sm:$0xff]
    %v89 = vld [vmem:[#allocation2 + $0x188] sm:$0xff]
    %v90 = vld [vmem:[#allocation2 + $0x190] sm:$0xff]
    %v91 = vld [vmem:[#allocation2 + $0x198] sm:$0xff]
    %v92 = vld [vmem:[#allocation2 + $0x1a0] sm:$0xff]
    %v93 = vld [vmem:[#allocation2 + $0x1a8] sm:$0xff]
    %v94 = vld [vmem:[#allocation2 + $0x1b0] sm:$0xff]
    %v95 = vld [vmem:[#allocation2 + $0x1b8] sm:$0xff]
    %v96 = vld [vmem:[#allocation2 + $0x1c0] sm:$0xff]
    %v97 = vld [vmem:[#allocation2 + $0x1c8] sm:$0xff]
    %v98 = vld [vmem:[#allocation2 + $0x1d0] sm:$0xff]
    %v99 = vld [vmem:[#allocation2 + $0x1d8] sm:$0xff]
    %v100 = vld [vmem:[#allocation2 + $0x1e0] sm:$0xff]
    %v101 = vld [vmem:[#allocation2 + $0x1e8] sm:$0xff]
    %v102 = vld [vmem:[#allocation2 + $0x1f0] sm:$0xff]
    %v103 = vld [vmem:[#allocation2 + $0x1f8] sm:$0xff]
    %v104 = vld [vmem:[#allocation2 + $0x200] sm:$0xff]
    %v105 = vld [vmem:[#allocation2 + $0x208] sm:$0xff]
    %v106 = vld [vmem:[#allocation2 + $0x210] sm:$0xff]
    %v107 = vld [vmem:[#allocation2 + $0x218] sm:$0xff]
    %v108 = vld [vmem:[#allocation2 + $0x220] sm:$0xff]
    %v109 = vld [vmem:[#allocation2 + $0x228] sm:$0xff]
    %v110 = vld [vmem:[#allocation2 + $0x230] sm:$0xff]
    %v111 = vld [vmem:[#allocation2 + $0x238] sm:$0xff]
    %v112 = vld [vmem:[#allocation2 + $0x240] sm:$0xff]
    %v113 = vld [vmem:[#allocation2 + $0x248] sm:$0xff]
    %v114 = vld [vmem:[#allocation2 + $0x250] sm:$0xff]
    %v115 = vld [vmem:[#allocation2 + $0x258] sm:$0xff]
    %v116 = vld [vmem:[#allocation2 + $0x260] sm:$0xff]
    %v117 = vld [vmem:[#allocation2 + $0x268] sm:$0xff]
    %v118 = vld [vmem:[#allocation2 + $0x270] sm:$0xff]
    %v119 = vld [vmem:[#allocation2 + $0x278] sm:$0xff]
    %v120 = vld [vmem:[#allocation2 + $0x280] sm:$0xff]
    %v121 = vld [vmem:[#allocation2 + $0x288] sm:$0xff]
    %v122 = vld [vmem:[#allocation2 + $0x290] sm:$0xff]
    %v123 = vld [vmem:[#allocation2 + $0x298] sm:$0xff]
    %v124 = vld [vmem:[#allocation2 + $0x2a0] sm:$0xff]
    %v125 = vld [vmem:[#allocation2 + $0x2a8] sm:$0xff]
    %v126 = vld [vmem:[#allocation2 + $0x2b0] sm:$0xff]
    %v127 = vld [vmem:[#allocation2 + $0x2b8] sm:$0xff]
    %v128 = vld [vmem:[#allocation2 + $0x2c0] sm:$0xff]
    %v129 = vld [vmem:[#allocation2 + $0x2c8] sm:$0xff]
    %v130 = vld [vmem:[#allocation2 + $0x2d0] sm:$0xff]
    %v131 = vld [vmem:[#allocation2 + $0x2d8] sm:$0xff]
    %v132 = vld [vmem:[#allocation2 + $0x2e0] sm:$0xff]
    %v133 = vld [vmem:[#allocation2 + $0x2e8] sm:$0xff]
    %v134 = vld [vmem:[#allocation2 + $0x2f0] sm:$0xff]
    %v135 = vld [vmem:[#allocation2 + $0x2f8] sm:$0xff]
    %v144 = vunpack.c.l.b16 %v32
    %v145 = vunpack.c.h.b16 %v32
    %v146 = vunpack.c.l.b16 %v33
    %v147 = vunpack.c.l.b16 %v34
    %v148 = vunpack.c.h.b16 %v34
    %v149 = vunpack.c.l.b16 %v35
    %v150 = vunpack.c.l.b16 %v36
    %v151 = vunpack.c.h.b16 %v36
    %v152 = vunpack.c.l.b16 %v37
    %v153 = vunpack.c.l.b16 %v38
    %v154 = vunpack.c.h.b16 %v38
    %v155 = vunpack.c.l.b16 %v39
    %v156 = vpack.c.b16 %v147, %v144
    %v157 = vpack.c.b16 %v148, %v145
    %v158 = vpack.c.b16 %v149, %v146
    %v159 = vpack.c.b16 %v153, %v150
    %v160 = vpack.c.b16 %v154, %v151
    %v161 = vpack.c.b16 %v155, %v152
    %v264 = vunpack.c.l.b16 %v40
    %v265 = vunpack.c.h.b16 %v40
    %v266 = vunpack.c.l.b16 %v41
    %v267 = vunpack.c.h.b16 %v41
    %v268 = vunpack.c.l.b16 %v42
    %v269 = vunpack.c.h.b16 %v42
    %v270 = vunpack.c.l.b16 %v43
    %v271 = vunpack.c.h.b16 %v43
    %v272 = vunpack.c.l.b16 %v44
    %v273 = vunpack.c.h.b16 %v44
    %v274 = vunpack.c.l.b16 %v45
    %v275 = vunpack.c.h.b16 %v45
    %v276 = vunpack.c.l.b16 %v46
    %v277 = vunpack.c.h.b16 %v46
    %v278 = vunpack.c.l.b16 %v47
    %v279 = vunpack.c.h.b16 %v47
    %v280 = vunpack.c.l.b16 %v48
    %v281 = vunpack.c.h.b16 %v48
    %v282 = vunpack.c.l.b16 %v49
    %v283 = vunpack.c.h.b16 %v49
    %v284 = vunpack.c.l.b16 %v50
    %v285 = vunpack.c.h.b16 %v50
    %v286 = vunpack.c.l.b16 %v51
    %v287 = vunpack.c.h.b16 %v51
    %v288 = vunpack.c.l.b16 %v52
    %v289 = vunpack.c.h.b16 %v52
    %v290 = vunpack.c.l.b16 %v53
    %v291 = vunpack.c.h.b16 %v53
    %v292 = vunpack.c.l.b16 %v54
    %v293 = vunpack.c.h.b16 %v54
    %v294 = vunpack.c.l.b16 %v55
    %v295 = vunpack.c.h.b16 %v55
    %v296 = vunpack.c.l.b16 %v56
    %v297 = vunpack.c.h.b16 %v56
    %v298 = vunpack.c.l.b16 %v57
    %v299 = vunpack.c.h.b16 %v57
    %v300 = vunpack.c.l.b16 %v58
    %v301 = vunpack.c.h.b16 %v58
    %v302 = vunpack.c.l.b16 %v59
    %v303 = vunpack.c.h.b16 %v59
    %v304 = vunpack.c.l.b16 %v60
    %v305 = vunpack.c.h.b16 %v60
    %v306 = vunpack.c.l.b16 %v61
    %v307 = vunpack.c.h.b16 %v61
    %v308 = vunpack.c.l.b16 %v62
    %v309 = vunpack.c.h.b16 %v62
    %v310 = vunpack.c.l.b16 %v63
    %v311 = vunpack.c.h.b16 %v63
    %v312 = vunpack.c.l.b16 %v64
    %v313 = vunpack.c.h.b16 %v64
    %v314 = vunpack.c.l.b16 %v65
    %v315 = vunpack.c.h.b16 %v65
    %v316 = vunpack.c.l.b16 %v66
    %v317 = vunpack.c.h.b16 %v66
    %v318 = vunpack.c.l.b16 %v67
    %v319 = vunpack.c.h.b16 %v67
    %v320 = vunpack.c.l.b16 %v68
    %v321 = vunpack.c.h.b16 %v68
    %v322 = vunpack.c.l.b16 %v69
    %v323 = vunpack.c.h.b16 %v69
    %v324 = vunpack.c.l.b16 %v70
    %v325 = vunpack.c.h.b16 %v70
    %v326 = vunpack.c.l.b16 %v71
    %v327 = vunpack.c.h.b16 %v71
    %v328 = vunpack.c.l.b16 %v72
    %v329 = vunpack.c.h.b16 %v72
    %v330 = vunpack.c.l.b16 %v73
    %v331 = vunpack.c.h.b16 %v73
    %v332 = vunpack.c.l.b16 %v74
    %v333 = vunpack.c.h.b16 %v74
    %v334 = vunpack.c.l.b16 %v75
    %v335 = vunpack.c.h.b16 %v75
    %v336 = vunpack.c.l.b16 %v76
    %v337 = vunpack.c.h.b16 %v76
    %v338 = vunpack.c.l.b16 %v77
    %v339 = vunpack.c.h.b16 %v77
    %v340 = vunpack.c.l.b16 %v78
    %v341 = vunpack.c.h.b16 %v78
    %v342 = vunpack.c.l.b16 %v79
    %v343 = vunpack.c.h.b16 %v79
    %v344 = vunpack.c.l.b16 %v80
    %v345 = vunpack.c.h.b16 %v80
    %v346 = vunpack.c.l.b16 %v81
    %v347 = vunpack.c.h.b16 %v81
    %v348 = vunpack.c.l.b16 %v82
    %v349 = vunpack.c.h.b16 %v82
    %v350 = vunpack.c.l.b16 %v83
    %v351 = vunpack.c.h.b16 %v83
    %v352 = vunpack.c.l.b16 %v84
    %v353 = vunpack.c.h.b16 %v84
    %v354 = vunpack.c.l.b16 %v85
    %v355 = vunpack.c.h.b16 %v85
    %v356 = vunpack.c.l.b16 %v86
    %v357 = vunpack.c.h.b16 %v86
    %v358 = vunpack.c.l.b16 %v87
    %v359 = vunpack.c.h.b16 %v87
    %v360 = vunpack.c.l.b16 %v88
    %v361 = vunpack.c.h.b16 %v88
    %v362 = vunpack.c.l.b16 %v89
    %v363 = vunpack.c.h.b16 %v89
    %v364 = vunpack.c.l.b16 %v90
    %v365 = vunpack.c.h.b16 %v90
    %v366 = vunpack.c.l.b16 %v91
    %v367 = vunpack.c.h.b16 %v91
    %v368 = vunpack.c.l.b16 %v92
    %v369 = vunpack.c.h.b16 %v92
    %v370 = vunpack.c.l.b16 %v93
    %v371 = vunpack.c.h.b16 %v93
    %v372 = vunpack.c.l.b16 %v94
    %v373 = vunpack.c.h.b16 %v94
    %v374 = vunpack.c.l.b16 %v95
    %v375 = vunpack.c.h.b16 %v95
    %v376 = vunpack.c.l.b16 %v96
    %v377 = vunpack.c.h.b16 %v96
    %v378 = vunpack.c.l.b16 %v97
    %v379 = vunpack.c.h.b16 %v97
    %v380 = vunpack.c.l.b16 %v98
    %v381 = vunpack.c.h.b16 %v98
    %v382 = vunpack.c.l.b16 %v99
    %v383 = vunpack.c.h.b16 %v99
    %v384 = vunpack.c.l.b16 %v100
    %v385 = vunpack.c.h.b16 %v100
    %v386 = vunpack.c.l.b16 %v101
    %v387 = vunpack.c.h.b16 %v101
    %v388 = vunpack.c.l.b16 %v102
    %v389 = vunpack.c.h.b16 %v102
    %v390 = vunpack.c.l.b16 %v103
    %v391 = vunpack.c.h.b16 %v103
    %v392 = vunpack.c.l.b16 %v104
    %v393 = vunpack.c.h.b16 %v104
    %v394 = vunpack.c.l.b16 %v105
    %v395 = vunpack.c.h.b16 %v105
    %v396 = vunpack.c.l.b16 %v106
    %v397 = vunpack.c.h.b16 %v106
    %v398 = vunpack.c.l.b16 %v107
    %v399 = vunpack.c.h.b16 %v107
    %v400 = vunpack.c.l.b16 %v108
    %v401 = vunpack.c.h.b16 %v108
    %v402 = vunpack.c.l.b16 %v109
    %v403 = vunpack.c.h.b16 %v109
    %v404 = vunpack.c.l.b16 %v110
    %v405 = vunpack.c.h.b16 %v110
    %v406 = vunpack.c.l.b16 %v111
    %v407 = vunpack.c.h.b16 %v111
    %v408 = vunpack.c.l.b16 %v112
    %v409 = vunpack.c.h.b16 %v112
    %v410 = vunpack.c.l.b16 %v113
    %v411 = vunpack.c.h.b16 %v113
    %v412 = vunpack.c.l.b16 %v114
    %v413 = vunpack.c.h.b16 %v114
    %v414 = vunpack.c.l.b16 %v115
    %v415 = vunpack.c.h.b16 %v115
    %v416 = vunpack.c.l.b16 %v116
    %v417 = vunpack.c.h.b16 %v116
    %v418 = vunpack.c.l.b16 %v117
    %v419 = vunpack.c.h.b16 %v117
    %v420 = vunpack.c.l.b16 %v118
    %v421 = vunpack.c.h.b16 %v118
    %v422 = vunpack.c.l.b16 %v119
    %v423 = vunpack.c.h.b16 %v119
    %v424 = vunpack.c.l.b16 %v120
    %v425 = vunpack.c.h.b16 %v120
    %v426 = vunpack.c.l.b16 %v121
    %v427 = vunpack.c.h.b16 %v121
    %v428 = vunpack.c.l.b16 %v122
    %v429 = vunpack.c.h.b16 %v122
    %v430 = vunpack.c.l.b16 %v123
    %v431 = vunpack.c.h.b16 %v123
    %v432 = vunpack.c.l.b16 %v124
    %v433 = vunpack.c.h.b16 %v124
    %v434 = vunpack.c.l.b16 %v125
    %v435 = vunpack.c.h.b16 %v125
    %v436 = vunpack.c.l.b16 %v126
    %v437 = vunpack.c.h.b16 %v126
    %v438 = vunpack.c.l.b16 %v127
    %v439 = vunpack.c.h.b16 %v127
    %v440 = vunpack.c.l.b16 %v128
    %v441 = vunpack.c.h.b16 %v128
    %v442 = vunpack.c.l.b16 %v129
    %v443 = vunpack.c.h.b16 %v129
    %v444 = vunpack.c.l.b16 %v130
    %v445 = vunpack.c.h.b16 %v130
    %v446 = vunpack.c.l.b16 %v131
    %v447 = vunpack.c.h.b16 %v131
    %v448 = vunpack.c.l.b16 %v132
    %v449 = vunpack.c.h.b16 %v132
    %v450 = vunpack.c.l.b16 %v133
    %v451 = vunpack.c.h.b16 %v133
    %v452 = vunpack.c.l.b16 %v134
    %v453 = vunpack.c.h.b16 %v134
    %v454 = vunpack.c.l.b16 %v135
    %v455 = vunpack.c.h.b16 %v135
    %v456 = vpack.c.b16 %v268, %v264
    %v457 = vpack.c.b16 %v269, %v265
    %v458 = vpack.c.b16 %v270, %v266
    %v459 = vpack.c.b16 %v271, %v267
    %v460 = vpack.c.b16 %v276, %v272
    %v461 = vpack.c.b16 %v277, %v273
    %v462 = vpack.c.b16 %v278, %v274
    %v463 = vpack.c.b16 %v279, %v275
    %v464 = vpack.c.b16 %v284, %v280
    %v465 = vpack.c.b16 %v285, %v281
    %v466 = vpack.c.b16 %v286, %v282
    %v467 = vpack.c.b16 %v287, %v283
    %v468 = vpack.c.b16 %v292, %v288
    %v469 = vpack.c.b16 %v293, %v289
    %v470 = vpack.c.b16 %v294, %v290
    %v471 = vpack.c.b16 %v295, %v291
    %v472 = vpack.c.b16 %v300, %v296
    %v473 = vpack.c.b16 %v301, %v297
    %v474 = vpack.c.b16 %v302, %v298
    %v475 = vpack.c.b16 %v303, %v299
    %v476 = vpack.c.b16 %v308, %v304
    %v477 = vpack.c.b16 %v309, %v305
    %v478 = vpack.c.b16 %v310, %v306
    %v479 = vpack.c.b16 %v311, %v307
    %v480 = vpack.c.b16 %v316, %v312
    %v481 = vpack.c.b16 %v317, %v313
    %v482 = vpack.c.b16 %v318, %v314
    %v483 = vpack.c.b16 %v319, %v315
    %v484 = vpack.c.b16 %v324, %v320
    %v485 = vpack.c.b16 %v325, %v321
    %v486 = vpack.c.b16 %v326, %v322
    %v487 = vpack.c.b16 %v327, %v323
    %v488 = vpack.c.b16 %v332, %v328
    %v489 = vpack.c.b16 %v333, %v329
    %v490 = vpack.c.b16 %v334, %v330
    %v491 = vpack.c.b16 %v335, %v331
    %v492 = vpack.c.b16 %v340, %v336
    %v493 = vpack.c.b16 %v341, %v337
    %v494 = vpack.c.b16 %v342, %v338
    %v495 = vpack.c.b16 %v343, %v339
    %v496 = vpack.c.b16 %v348, %v344
    %v497 = vpack.c.b16 %v349, %v345
    %v498 = vpack.c.b16 %v350, %v346
    %v499 = vpack.c.b16 %v351, %v347
    %v500 = vpack.c.b16 %v356, %v352
    %v501 = vpack.c.b16 %v357, %v353
    %v502 = vpack.c.b16 %v358, %v354
    %v503 = vpack.c.b16 %v359, %v355
    %v504 = vpack.c.b16 %v364, %v360
    %v505 = vpack.c.b16 %v365, %v361
    %v506 = vpack.c.b16 %v366, %v362
    %v507 = vpack.c.b16 %v367, %v363
    %v508 = vpack.c.b16 %v372, %v368
    %v509 = vpack.c.b16 %v373, %v369
    %v510 = vpack.c.b16 %v374, %v370
    %v511 = vpack.c.b16 %v375, %v371
    %v512 = vpack.c.b16 %v380, %v376
    %v513 = vpack.c.b16 %v381, %v377
    %v514 = vpack.c.b16 %v382, %v378
    %v515 = vpack.c.b16 %v383, %v379
    %v516 = vpack.c.b16 %v388, %v384
    %v517 = vpack.c.b16 %v389, %v385
    %v518 = vpack.c.b16 %v390, %v386
    %v519 = vpack.c.b16 %v391, %v387
    %v520 = vpack.c.b16 %v396, %v392
    %v521 = vpack.c.b16 %v397, %v393
    %v522 = vpack.c.b16 %v398, %v394
    %v523 = vpack.c.b16 %v399, %v395
    %v524 = vpack.c.b16 %v404, %v400
    %v525 = vpack.c.b16 %v405, %v401
    %v526 = vpack.c.b16 %v406, %v402
    %v527 = vpack.c.b16 %v407, %v403
    %v528 = vpack.c.b16 %v412, %v408
    %v529 = vpack.c.b16 %v413, %v409
    %v530 = vpack.c.b16 %v414, %v410
    %v531 = vpack.c.b16 %v415, %v411
    %v532 = vpack.c.b16 %v420, %v416
    %v533 = vpack.c.b16 %v421, %v417
    %v534 = vpack.c.b16 %v422, %v418
    %v535 = vpack.c.b16 %v423, %v419
    %v536 = vpack.c.b16 %v428, %v424
    %v537 = vpack.c.b16 %v429, %v425
    %v538 = vpack.c.b16 %v430, %v426
    %v539 = vpack.c.b16 %v431, %v427
    %v540 = vpack.c.b16 %v436, %v432
    %v541 = vpack.c.b16 %v437, %v433
    %v542 = vpack.c.b16 %v438, %v434
    %v543 = vpack.c.b16 %v439, %v435
    %v544 = vpack.c.b16 %v444, %v440
    %v545 = vpack.c.b16 %v445, %v441
    %v546 = vpack.c.b16 %v446, %v442
    %v547 = vpack.c.b16 %v447, %v443
    %v548 = vpack.c.b16 %v452, %v448
    %v549 = vpack.c.b16 %v453, %v449
    %v550 = vpack.c.b16 %v454, %v450
    %v551 = vpack.c.b16 %v455, %v451
    %648 = vmatprep.subr.bf16.mxu0 %v485
    %649 = vmatpush1.bf16.msra.mxu0 %v484
    %650 = vmatprep.subr.bf16.mxu0 %v481
    %651 = vmatpush1.bf16.msra.mxu0 %v480
    %652 = vmatprep.subr.bf16.mxu0 %v477
    %653 = vmatpush1.bf16.msra.mxu0 %v476
    %654 = vmatprep.subr.bf16.mxu0 %v473
    %655 = vmatpush1.bf16.msra.mxu0 %v472
    %656 = vmatprep.subr.bf16.mxu0 %v469
    %657 = vmatpush1.bf16.msra.mxu0 %v468
    %658 = vmatprep.subr.bf16.mxu0 %v465
    %659 = vmatpush1.bf16.msra.mxu0 %v464
    %660 = vmatprep.subr.bf16.mxu0 %v461
    %661 = vmatpush1.bf16.msra.mxu0 %v460
    %662 = vmatprep.subr.bf16.mxu0 %v457
    %663 = vmatpush1.bf16.msra.mxu0 %v456
    %664 = vmatprep.subr.bf16.mxu0 %v517
    %665 = vmatpush2.bf16.msra.mxu0 %v516
    %666 = vmatprep.subr.bf16.mxu0 %v513
    %667 = vmatpush2.bf16.msra.mxu0 %v512
    %668 = vmatprep.subr.bf16.mxu0 %v509
    %669 = vmatpush2.bf16.msra.mxu0 %v508
    %670 = vmatprep.subr.bf16.mxu0 %v505
    %671 = vmatpush2.bf16.msra.mxu0 %v504
    %672 = vmatprep.subr.bf16.mxu0 %v501
    %673 = vmatpush2.bf16.msra.mxu0 %v500
    %674 = vmatprep.subr.bf16.mxu0 %v497
    %675 = vmatpush2.bf16.msra.mxu0 %v496
    %676 = vmatprep.subr.bf16.mxu0 %v493
    %677 = vmatpush2.bf16.msra.mxu0 %v492
    %678 = vmatprep.subr.bf16.mxu0 %v489
    %679 = vmatpush2.bf16.msra.mxu0 %v488
    %680 = vmatprep.mubr.bf16.mxu0 %v157
    %681 = vmatmul.mubr.bf16.gmra.mxu0 %v156
    %v682 = vpop.f32.mrf.mxu0
    %v683 = vadd.f32 0.0, %v682
    %v684 = vpop.f32.mrf.mxu0
    %v685 = vadd.f32 0.0, %v684
    %v686 = vpop.f32.mrf.mxu0
    %v687 = vpop.f32.mrf.mxu0
    %688 = vmatprep.mubr.bf16.mxu0 %v160
    %689 = vmatmul.mubr.bf16.gmra.mxu0 %v159
    %v690 = vpop.f32.mrf.mxu0
    %v691 = vadd.f32 0.0, %v690
    %v692 = vpop.f32.mrf.mxu0
    %v693 = vadd.f32 0.0, %v692
    %v694 = vpop.f32.mrf.mxu0
    %v695 = vpop.f32.mrf.mxu0
    %696 = vdwg.mxu0
    %697 = vmatprep.subr.bf16.mxu0 %v549
    %698 = vmatpush1.bf16.msra.mxu0 %v548
    %699 = vmatprep.subr.bf16.mxu0 %v545
    %700 = vmatpush1.bf16.msra.mxu0 %v544
    %701 = vmatprep.subr.bf16.mxu0 %v541
    %702 = vmatpush1.bf16.msra.mxu0 %v540
    %703 = vmatprep.subr.bf16.mxu0 %v537
    %704 = vmatpush1.bf16.msra.mxu0 %v536
    %705 = vmatprep.subr.bf16.mxu0 %v533
    %706 = vmatpush1.bf16.msra.mxu0 %v532
    %707 = vmatprep.subr.bf16.mxu0 %v529
    %708 = vmatpush1.bf16.msra.mxu0 %v528
    %709 = vmatprep.subr.bf16.mxu0 %v525
    %710 = vmatpush1.bf16.msra.mxu0 %v524
    %711 = vmatprep.subr.bf16.mxu0 %v521
    %712 = vmatpush1.bf16.msra.mxu0 %v520
    %713 = vmatprep.subr.bf16.mxu0 0
    %714 = vmatpush2.bf16.msra.mxu0 0
    %715 = vmatprep.subr.bf16.mxu0 0
    %716 = vmatpush2.bf16.msra.mxu0 0
    %717 = vmatprep.subr.bf16.mxu0 0
    %718 = vmatpush2.bf16.msra.mxu0 0
    %719 = vmatprep.subr.bf16.mxu0 0
    %720 = vmatpush2.bf16.msra.mxu0 0
    %721 = vmatprep.subr.bf16.mxu0 0
    %722 = vmatpush2.bf16.msra.mxu0 0
    %723 = vmatprep.subr.bf16.mxu0 0
    %724 = vmatpush2.bf16.msra.mxu0 0
    %725 = vmatprep.subr.bf16.mxu0 0
    %726 = vmatpush2.bf16.msra.mxu0 0
    %727 = vmatprep.subr.bf16.mxu0 0
    %728 = vmatpush2.bf16.msra.mxu0 0
    %729 = vmatprep.mubr.bf16.mxu0 0
    %730 = vmatmul.mubr.bf16.gmra.mxu0 %v158
    %v731 = vpop.f32.mrf.mxu0
    %v732 = vadd.f32 %v683, %v731
    %v733 = vpop.f32.mrf.mxu0
    %v734 = vadd.f32 %v685, %v733
    %v735 = vpop.f32.mrf.mxu0
    %v736 = vpop.f32.mrf.mxu0
    %737 = vmatprep.mubr.bf16.mxu0 0
    %738 = vmatmul.mubr.bf16.gmra.mxu0 %v161
    %v739 = vpop.f32.mrf.mxu0
    %v740 = vadd.f32 %v691, %v739
    %v741 = vpop.f32.mrf.mxu0
    %v742 = vadd.f32 %v693, %v741
    %v743 = vpop.f32.mrf.mxu0
    %v744 = vpop.f32.mrf.mxu0
    %745 = vdwg.mxu0
    %746 = vmatprep.subr.bf16.mxu0 %v487
    %747 = vmatpush1.bf16.msra.mxu0 %v486
    %748 = vmatprep.subr.bf16.mxu0 %v483
    %749 = vmatpush1.bf16.msra.mxu0 %v482
    %750 = vmatprep.subr.bf16.mxu0 %v479
    %751 = vmatpush1.bf16.msra.mxu0 %v478
    %752 = vmatprep.subr.bf16.mxu0 %v475
    %753 = vmatpush1.bf16.msra.mxu0 %v474
    %754 = vmatprep.subr.bf16.mxu0 %v471
    %755 = vmatpush1.bf16.msra.mxu0 %v470
    %756 = vmatprep.subr.bf16.mxu0 %v467
    %757 = vmatpush1.bf16.msra.mxu0 %v466
    %758 = vmatprep.subr.bf16.mxu0 %v463
    %759 = vmatpush1.bf16.msra.mxu0 %v462
    %760 = vmatprep.subr.bf16.mxu0 %v459
    %761 = vmatpush1.bf16.msra.mxu0 %v458
    %762 = vmatprep.subr.bf16.mxu0 %v519
    %763 = vmatpush2.bf16.msra.mxu0 %v518
    %764 = vmatprep.subr.bf16.mxu0 %v515
    %765 = vmatpush2.bf16.msra.mxu0 %v514
    %766 = vmatprep.subr.bf16.mxu0 %v511
    %767 = vmatpush2.bf16.msra.mxu0 %v510
    %768 = vmatprep.subr.bf16.mxu0 %v507
    %769 = vmatpush2.bf16.msra.mxu0 %v506
    %770 = vmatprep.subr.bf16.mxu0 %v503
    %771 = vmatpush2.bf16.msra.mxu0 %v502
    %772 = vmatprep.subr.bf16.mxu0 %v499
    %773 = vmatpush2.bf16.msra.mxu0 %v498
    %774 = vmatprep.subr.bf16.mxu0 %v495
    %775 = vmatpush2.bf16.msra.mxu0 %v494
    %776 = vmatprep.subr.bf16.mxu0 %v491
    %777 = vmatpush2.bf16.msra.mxu0 %v490
    %778 = vmatprep.mubr.bf16.mxu0 %v157
    %779 = vmatmul.mubr.bf16.gmra.mxu0 %v156
    %v780 = vpop.f32.mrf.mxu0
    %v781 = vadd.f32 0.0, %v780
    %v782 = vpop.f32.mrf.mxu0
    %v783 = vadd.f32 0.0, %v782
    %v784 = vpop.f32.mrf.mxu0
    %v785 = vpop.f32.mrf.mxu0
    %786 = vmatprep.mubr.bf16.mxu0 %v160
    %787 = vmatmul.mubr.bf16.gmra.mxu0 %v159
    %v788 = vpop.f32.mrf.mxu0
    %v789 = vadd.f32 0.0, %v788
    %v790 = vpop.f32.mrf.mxu0
    %v791 = vadd.f32 0.0, %v790
    %v792 = vpop.f32.mrf.mxu0
    %v793 = vpop.f32.mrf.mxu0
    %794 = vdwg.mxu0
    %795 = vmatprep.subr.bf16.mxu0 %v551
    %796 = vmatpush1.bf16.msra.mxu0 %v550
    %797 = vmatprep.subr.bf16.mxu0 %v547
    %798 = vmatpush1.bf16.msra.mxu0 %v546
    %799 = vmatprep.subr.bf16.mxu0 %v543
    %800 = vmatpush1.bf16.msra.mxu0 %v542
    %801 = vmatprep.subr.bf16.mxu0 %v539
    %802 = vmatpush1.bf16.msra.mxu0 %v538
    %803 = vmatprep.subr.bf16.mxu0 %v535
    %804 = vmatpush1.bf16.msra.mxu0 %v534
    %805 = vmatprep.subr.bf16.mxu0 %v531
    %806 = vmatpush1.bf16.msra.mxu0 %v530
    %807 = vmatprep.subr.bf16.mxu0 %v527
    %808 = vmatpush1.bf16.msra.mxu0 %v526
    %809 = vmatprep.subr.bf16.mxu0 %v523
    %810 = vmatpush1.bf16.msra.mxu0 %v522
    %811 = vmatprep.subr.bf16.mxu0 0
    %812 = vmatpush2.bf16.msra.mxu0 0
    %813 = vmatprep.subr.bf16.mxu0 0
    %814 = vmatpush2.bf16.msra.mxu0 0
    %815 = vmatprep.subr.bf16.mxu0 0
    %816 = vmatpush2.bf16.msra.mxu0 0
    %817 = vmatprep.subr.bf16.mxu0 0
    %818 = vmatpush2.bf16.msra.mxu0 0
    %819 = vmatprep.subr.bf16.mxu0 0
    %820 = vmatpush2.bf16.msra.mxu0 0
    %821 = vmatprep.subr.bf16.mxu0 0
    %822 = vmatpush2.bf16.msra.mxu0 0
    %823 = vmatprep.subr.bf16.mxu0 0
    %824 = vmatpush2.bf16.msra.mxu0 0
    %825 = vmatprep.subr.bf16.mxu0 0
    %826 = vmatpush2.bf16.msra.mxu0 0
    %827 = vmatprep.mubr.bf16.mxu0 0
    %828 = vmatmul.mubr.bf16.gmra.mxu0 %v158
    %v829 = vpop.f32.mrf.mxu0
    %v830 = vadd.f32 %v781, %v829
    %v831 = vpop.f32.mrf.mxu0
    %v832 = vadd.f32 %v783, %v831
    %v833 = vpop.f32.mrf.mxu0
    %v834 = vpop.f32.mrf.mxu0
    %835 = vmatprep.mubr.bf16.mxu0 0
    %836 = vmatmul.mubr.bf16.gmra.mxu0 %v161
    %v837 = vpop.f32.mrf.mxu0
    %v838 = vadd.f32 %v789, %v837
    %v839 = vpop.f32.mrf.mxu0
    %v840 = vadd.f32 %v791, %v839
    %v841 = vpop.f32.mrf.mxu0
    %v842 = vpop.f32.mrf.mxu0
    %843 = vdwg.mxu0
    %844 = vst [vmem:[#allocation5] sm:$0xf] %v732
    %s845 = scalar_lea.vmem [#allocation5], 4
    %846 = vst [vmem:[%s845] sm:$0xf] %v734
    %s847 = scalar_lea.vmem [#allocation5], 8
    %848 = vst [vmem:[%s847] sm:$0xf] %v830
    %s849 = scalar_lea.vmem [#allocation5], 12
    %850 = vst [vmem:[%s849] sm:$0xf] %v832
    %s851 = scalar_lea.vmem [#allocation5], 16
    %852 = vst [vmem:[%s851] sm:$0xf] %v740
    %s853 = scalar_lea.vmem [#allocation5], 20
    %854 = vst [vmem:[%s853] sm:$0xf] %v742
    %s855 = scalar_lea.vmem [#allocation5], 24
    %856 = vst [vmem:[%s855] sm:$0xf] %v838
    %s857 = scalar_lea.vmem [#allocation5], 28
    %858 = vst [vmem:[%s857] sm:$0xf] %v840
    // Predicated region
    $region14: #{_forward.1} parent=1 // pred_check
      _
    $region15: #{_forward.1} parent=1 // pred_check_branch
      %860 = sbr.rel (0) target = $region17
    $region16: #{_forward.1} parent=1 // pred_region
      %s862 = ssub.s32 512, 512
      %863 = vsyncadd [#allocation4], %s862
      %s864 = sshll.u32 [#allocation5], 4
      %s865 = int_to_ptr.vmem [resolvable:$true] %s864
      %870 = dma.vmem_to_hbm [thread:$0]  %s865, 512, %s2, [#allocation4], 64, 64, 4
    $region17: #{_forward.1} parent=1 // pred_fallthru
      _
    // Predicated region
    $region18: #{_forward.1} parent=1 // pred_check
      _
    $region19: #{_forward.1} parent=1 // pred_check_branch
      %872 = sbr.rel (0) target = $region21
    $region20: #{_forward.1} parent=1 // pred_region
      %873 = dma.done [#allocation4], 512
    $region21: #{_forward.1} parent=1 // pred_fallthru
      _
    %874 = vsyncpa [#allocation3], 1
    %875 = vsyncpa [#allocation4], 1

</llo_original>
